<compile_context>
chip_gen: v5e
topology: v5e:2x2
jax: 0.10.0
libtpu: 0.0.40
codegen_flags: <defaults>
</compile_context>

<pallas_src>
import jax
import jax.numpy as jnp
import numpy as np
from jax.experimental import pallas as pl
from jax.experimental.pallas import tpu as pltpu

BN_EPS = 1e-5


def _round_up(v, m):
    return (v + m - 1) // m * m


def _vmem_capacity_bytes():
    try:
        info = pltpu.get_tpu_info()
        cap = int(getattr(info, "vmem_capacity_bytes", 0))
        if cap > 0:
            return cap
    except Exception:
        pass
    return 64 * 1024 * 1024  # conservative: v7x per-TensorCore VMEM


def vrgcn_block_sparse_kernel(nkb_ref, kid_ref, m_ref, w_ref, inv_du_ref, o_ref):
    """o[i-tile] = inv_du[i-tile] * sum over non-zero K blocks of M[i,kb] @ W[kb]."""
    i = pl.program_id(0)
    j = pl.program_id(1)

    @pl.when(j == 0)
    def _init():
        o_ref[...] = jnp.zeros_like(o_ref)

    # Only the first nkb[i] schedule slots carry a non-zero block for this row
    # tile; padded slots repeat the previous block index (no re-DMA) and skip MXU.
    @pl.when(j < nkb_ref[i])
    def _acc():
        o_ref[...] += jnp.dot(m_ref[...], w_ref[...],
                              preferred_element_type=jnp.float32)

    @pl.when(j == pl.num_programs(1) - 1)
    def _fin():
        o_ref[...] = o_ref[...] * inv_du_ref[...]


def vrgcn_conv(x, edges, rels, r, kernels, gamma, beta, *,
               tm_max=None, tk_max=None, use_bf16=None):
    """x: (e, dim) f32, edges: (2, E) i32, rels: (E,) i32, r: (num_rels, dim) f32.

    Note: the wrapper builds the block-sparse schedule on the host (numpy), so
    it is not jit-able as a whole; the pallas_call itself is compiled normally.
    """
    f32 = jnp.float32
    e, dim = x.shape
    num_rels = r.shape[0]
    E = edges.shape[1]

    heads = edges[0].astype(jnp.int32)
    tails = edges[1].astype(jnp.int32)
    rel_idx = rels.astype(jnp.int32)
    heads_np = np.asarray(heads)
    tails_np = np.asarray(tails)
    rels_np = np.asarray(rel_idx)

    # ---- Device-aware tile defaults & VMEM budget (v7x has only 64 MiB). ----
    vmem_cap = _vmem_capacity_bytes()
    big_vmem = vmem_cap >= (100 << 20)            # v5e / v6e (128 MiB VMEM)
    if tm_max is None:
        tm_max = 1024 if big_vmem else 512
    if tk_max is None:
        tk_max = 2048 if big_vmem else 1024
    assert tm_max % 16 == 0 and tk_max % 128 == 0
    budget = max(8 << 20, (vmem_cap * 3) // 4)    # <= ~48 MiB on v7x

    # ---- bf16 only when integer counts stay exact (<= 256). ----
    if use_bf16 is None:
        if E > 0:
            pair = tails_np.astype(np.int64) * e + heads_np.astype(np.int64)
            max_pair = int(np.unique(pair, return_counts=True)[1].max())
            nr_t = tails_np.astype(np.int64) * num_rels + rels_np
            nr_h = heads_np.astype(np.int64) * num_rels + rels_np
            max_nr = int(max(np.unique(nr_t, return_counts=True)[1].max(),
                             np.unique(nr_h, return_counts=True)[1].max()))
        else:
            max_pair = max_nr = 0
        use_bf16 = (2 * max_pair + 1 <= 256) and (max_nr <= 256)
    mxu_dtype = jnp.bfloat16 if use_bf16 else f32
    msz = 2 if use_bf16 else 4

    # ---- BatchNorm1d (training-mode biased batch stats) folded with `kernels`.
    mean = jnp.mean(x, axis=0, keepdims=True)
    var = jnp.mean((x - mean) ** 2, axis=0, keepdims=True)
    inv_std = jax.lax.rsqrt(var + BN_EPS)
    scale = gamma * inv_std * kernels
    shift = (beta - gamma * mean * inv_std) * kernels
    x_k = x * scale + shift                        # == BN(x) * kernels
    r_k = r * kernels
    # TODO(synk): training-time dropout (dropout_rate > 0) is not implemented.

    # ---- Degrees, O(E) (intended per-edge semantics of get_degree). ----
    not_self = (heads != tails).astype(f32)
    du = (jnp.ones((e,), f32).at[heads].add(not_self).at[tails].add(not_self))
    inv_du = (1.0 / du).reshape(e, 1)

    # ---- Tile selection (16-aligned, lanes padded to 128, budget-checked). ----
    dim_p = _round_up(dim, 128)

    def _est(tm_, tk_):
        # double-buffered M / W / inv_du tiles + double-buffered f32 out block
        return 2 * (tm_ * tk_ * msz + tk_ * dim_p * msz + tm_ * 4 + tm_ * dim_p * 4)

    if e > tm_max:
        tm = tm_max
    else:
        # >= 2 row tiles when possible so both v7x TensorCores get work.
        tm = min(tm_max, max(16, _round_up(-(-e // 2), 16)))
    while True:
        e_p = _round_up(e, tm)
        k_raw = e_p + num_rels
        tk = _round_up(k_raw, 16) if k_raw <= tk_max else tk_max
        while _est(tm, tk) > budget and tk > 128:
            tk = max(128, ((tk // 2) // 128) * 128)
        if _est(tm, tk) <= budget or tm <= 16:
            break
        tm = max(16, ((tm // 2) // 16) * 16)
    k_p = _round_up(k_raw, tk)
    # TODO(synk): for very large `dim`, also tile the feature (lane) axis.

    # ---- M = [A + A^T + I | S_in - S_out | 0], ONE fused scatter + one cast.
    eye_idx = jnp.arange(e, dtype=jnp.int32)
    rows_all = jnp.concatenate([tails, heads, eye_idx, tails, heads])
    cols_all = jnp.concatenate([heads, tails, eye_idx,
                                e_p + rel_idx, e_p + rel_idx])
    vals_all = jnp.concatenate([jnp.ones((2 * E + e,), f32),
                                jnp.ones((E,), f32),
                                -jnp.ones((E,), f32)])
    m_mat = (jnp.zeros((e_p, k_p), f32)
             .at[rows_all, cols_all].add(vals_all)
             .astype(mxu_dtype))

    # W = [x_k ; r_k ; 0]  (k_p, dim_p)
    w_mat = jnp.zeros((k_p, dim_p), f32)
    w_mat = w_mat.at[:e, :dim].set(x_k)
    w_mat = w_mat.at[e_p:e_p + num_rels, :dim].set(r_k)
    w_mat = w_mat.astype(mxu_dtype)

    inv_du_p = jnp.ones((e_p, 1), f32).at[:e, :].set(inv_du)

    # ---- Block-sparse K schedule (host, O(E)): non-zero K blocks per row tile.
    nib = e_p // tm
    nkt = k_p // tk
    occ = np.zeros((nib, nkt), dtype=bool)
    node = np.arange(e)
    occ[node // tm, node // tk] = True                  # I
    if E > 0:
        occ[tails_np // tm, heads_np // tk] = True      # A
        occ[heads_np // tm, tails_np // tk] = True      # A^T
        rel_cols = e_p + rels_np
        occ[tails_np // tm, rel_cols // tk] = True      # +S_in
        occ[heads_np // tm, rel_cols // tk] = True      # -S_out
    counts = occ.sum(axis=1).astype(np.int32)           # >= 1 (diagonal block)
    max_nk = int(counts.max())
    kid = np.zeros((nib, max_nk), dtype=np.int32)
    for it in range(nib):
        nz = np.nonzero(occ[it])[0].astype(np.int32)
        kid[it, :counts[it]] = nz
        kid[it, counts[it]:] = nz[-1]    # repeat last id -> pipeline skips re-DMA
    nkb_arr = jnp.asarray(counts)                        # (nib,)  int32, SMEM
    kid_flat = jnp.asarray(kid.reshape(-1))              # (nib*max_nk,) int32, SMEM

    def m_index_map(i, j, nkb_ref, kid_ref):
        return (i, kid_ref[i * max_nk + j])

    def w_index_map(i, j, nkb_ref, kid_ref):
        return (kid_ref[i * max_nk + j], 0)

    vmem_limit = int(min(budget, max(16 << 20, 2 * _est(tm, tk))))

    out_p = pl.pallas_call(
        vrgcn_block_sparse_kernel,
        out_shape=jax.ShapeDtypeStruct((e_p, dim_p), jnp.float32),
        grid_spec=pltpu.PrefetchScalarGridSpec(
            num_scalar_prefetch=2,
            grid=(nib, max_nk),
            in_specs=[
                pl.BlockSpec((tm, tk), m_index_map),       # adjacency block
                pl.BlockSpec((tk, dim_p), w_index_map),    # feature K block
                pl.BlockSpec((tm, 1), lambda i, j, nkb, kid: (i, 0)),  # 1/du
            ],
            out_specs=pl.BlockSpec((tm, dim_p), lambda i, j, nkb, kid: (i, 0)),
        ),
        compiler_params=pltpu.CompilerParams(
            dimension_semantics=("parallel", "arbitrary"),
            vmem_limit_bytes=vmem_limit,
        ),
    )(nkb_arr, kid_flat, m_mat, w_mat, inv_du_p)

    return out_p[:e, :dim]


def vrgcn_ref(x, edges, rels, r, kernels, gamma, beta):
    """Pure-JAX f32 reference mirroring the PyTorch forward (self-check)."""
    e = x.shape[0]
    mean = x.mean(0)
    var = ((x - mean) ** 2).mean(0)
    x_bn = (x - mean) / jnp.sqrt(var + BN_EPS) * gamma + beta
    x_k = x_bn * kernels
    r_k = r * kernels
    head = x_k[edges[0]]
    tail = x_k[edges[1]]
    rel = r_k[rels]
    recv = head + rel
    send = tail - rel
    sum_in = jnp.zeros_like(x_k).at[edges[1]].add(recv)
    sum_out = jnp.zeros_like(x_k).at[edges[0]].add(send)
    not_self = (edges[0] != edges[1]).astype(jnp.float32)
    du = (jnp.ones((e,), jnp.float32)
          .at[edges[0]].add(not_self).at[edges[1]].add(not_self))
    return (sum_in + sum_out + x_k) / du[:, None]


if __name__ == "__main__":
    key = jax.random.PRNGKey(0)
    k1, k2, k3, k4 = jax.random.split(key, 4)

    # Case 1: small module-consistent shapes, default device-aware tiles, bf16.
    e, dim, E, num_rels = 8, 32, 16, 4
    x = jax.random.normal(k1, (e, dim), jnp.float32)
    r = jax.random.normal(k2, (num_rels, dim), jnp.float32)
    edges = jax.random.randint(k3, (2, E), 0, e, dtype=jnp.int32)
    rels = jax.random.randint(k4, (E,), 0, num_rels, dtype=jnp.int32)
    kernels = jnp.ones((1, dim), jnp.float32)   # nn.Parameter(torch.ones(1, dim))
    gamma = jnp.ones((1, dim), jnp.float32)     # BatchNorm1d weight init
    beta = jnp.zeros((1, dim), jnp.float32)     # BatchNorm1d bias init
    out = jax.block_until_ready(vrgcn_conv(x, edges, rels, r, kernels, gamma, beta))
    ref = vrgcn_ref(x, edges, rels, r, kernels, gamma, beta)
    assert out.shape == (e, dim)
    assert np.allclose(np.asarray(out), np.asarray(ref), atol=5e-2, rtol=5e-2)

    # Case 2: multi-tile grid, padding, data-dependent K schedule; f32 operands
    # for a tighter numerical check.
    j1, j2, j3, j4 = jax.random.split(jax.random.PRNGKey(0), 4)
    e2, dim2, E2, nr2 = 150, 96, 600, 7
    x2 = jax.random.normal(j1, (e2, dim2), jnp.float32)
    r2 = jax.random.normal(j2, (nr2, dim2), jnp.float32)
    edges2 = jax.random.randint(j3, (2, E2), 0, e2, dtype=jnp.int32)
    rels2 = jax.random.randint(j4, (E2,), 0, nr2, dtype=jnp.int32)
    p2 = (jnp.ones((1, dim2), jnp.float32), jnp.ones((1, dim2), jnp.float32),
          jnp.zeros((1, dim2), jnp.float32))
    out2 = jax.block_until_ready(
        vrgcn_conv(x2, edges2, rels2, r2, *p2,
                   tm_max=32, tk_max=128, use_bf16=False))
    ref2 = vrgcn_ref(x2, edges2, rels2, r2, *p2)
    assert out2.shape == (e2, dim2)
    assert np.allclose(np.asarray(out2), np.asarray(ref2), atol=1e-2, rtol=1e-2)

    # Case 3: block-structured graph (3 disconnected groups of 64 nodes) so row
    # tiles visit DIFFERENT numbers of non-zero K blocks -> exercises the
    # nkb/kid scalar-prefetch schedule, padded slots, and pl.when gating.
    g1, g2, g3, g4, g5 = jax.random.split(jax.random.PRNGKey(1), 5)
    e3, dim3, E3, nr3 = 192, 64, 300, 5
    grp = jax.random.randint(g1, (E3,), 0, 3, dtype=jnp.int32)
    hin = jax.random.randint(g2, (E3,), 0, 64, dtype=jnp.int32)
    tin = jax.random.randint(g3, (E3,), 0, 64, dtype=jnp.int32)
    edges3 = jnp.stack([grp * 64 + hin, grp * 64 + tin])
    rels3 = jax.random.randint(g4, (E3,), 0, nr3, dtype=jnp.int32)
    x3 = jax.random.normal(g5, (e3, dim3), jnp.float32)
    r3 = jax.random.normal(g1, (nr3, dim3), jnp.float32)
    p3 = (jnp.ones((1, dim3), jnp.float32), jnp.ones((1, dim3), jnp.float32),
          jnp.zeros((1, dim3), jnp.float32))
    out3 = jax.block_until_ready(
        vrgcn_conv(x3, edges3, rels3, r3, *p3,
                   tm_max=64, tk_max=128, use_bf16=False))
    ref3 = vrgcn_ref(x3, edges3, rels3, r3, *p3)
    assert out3.shape == (e3, dim3)
    assert np.allclose(np.asarray(out3), np.asarray(ref3), atol=1e-2, rtol=1e-2)

    print("KERNEL_OK")
</pallas_src>

<mosaic_0001>
module attributes {stable_mosaic.version = 11 : i64} {
  func.func @vrgcn_block_sparse_kernel(%arg0: i32, %arg1: i32, %arg2: memref<1xi32, #tpu.memory_space<smem>>, %arg3: memref<1xi32, #tpu.memory_space<smem>>, %arg4: memref<16x32xbf16, #tpu.memory_space<vmem>>, %arg5: memref<32x128xbf16, #tpu.memory_space<vmem>>, %arg6: memref<16x1xf32, #tpu.memory_space<vmem>>, %arg7: memref<16x128xf32, #tpu.memory_space<vmem>>) attributes {dimension_semantics = [#tpu.dimension_semantics<parallel>, #tpu.dimension_semantics<arbitrary>], iteration_bounds = array<i64: 1, 1>, scalar_prefetch = 2 : i64, scratch_operands = 0 : i64, tpu.core_type = #tpu.core_type<tc>, window_params = [{transform_indices = @transform_0, window_bounds = array<i64: 16, 32>}, {transform_indices = @transform_1, window_bounds = array<i64: 32, 128>}, {transform_indices = @transform_2, window_bounds = array<i64: 16, 1>}, {transform_indices = @transform_3, window_bounds = array<i64: 16, 128>}]} {
    %c0_i32 = arith.constant 0 : i32
    %0 = arith.cmpi eq, %arg1, %c0_i32 : i32
    %1 = arith.extui %0 : i1 to i32
    %c0_i32_0 = arith.constant 0 : i32
    %2 = arith.cmpi ne, %1, %c0_i32_0 : i32
    scf.if %2 {
      %cst = arith.constant 0.000000e+00 : f32
      %11 = vector.broadcast %cst : f32 to vector<16x128xf32>
      %c0 = arith.constant 0 : index
      %c0_4 = arith.constant 0 : index
      %12 = vector.load %arg7[%c0, %c0_4] : memref<16x128xf32, #tpu.memory_space<vmem>>, vector<16x128xf32>
      tpu.vector_store %arg7[%c0, %c0_4], %11 {strides = array<i32>} : memref<16x128xf32, #tpu.memory_space<vmem>>, vector<16x128xf32>,
    } else {
    }
    %3 = arith.index_cast %arg0 : i32 to index
    %4 = memref.load %arg2[%3] : memref<1xi32, #tpu.memory_space<smem>>
    %5 = arith.cmpi slt, %arg1, %4 : i32
    %6 = arith.extui %5 : i1 to i32
    %c0_i32_1 = arith.constant 0 : i32
    %7 = arith.cmpi ne, %6, %c0_i32_1 : i32
    scf.if %7 {
      %c0 = arith.constant 0 : index
      %c0_4 = arith.constant 0 : index
      %11 = vector.load %arg7[%c0, %c0_4] : memref<16x128xf32, #tpu.memory_space<vmem>>, vector<16x128xf32>
      %c0_5 = arith.constant 0 : index
      %c0_6 = arith.constant 0 : index
      %12 = vector.load %arg4[%c0_5, %c0_6] : memref<16x32xbf16, #tpu.memory_space<vmem>>, vector<16x32xbf16>
      %c0_7 = arith.constant 0 : index
      %c0_8 = arith.constant 0 : index
      %13 = vector.load %arg5[%c0_7, %c0_8] : memref<32x128xbf16, #tpu.memory_space<vmem>>, vector<32x128xbf16>
      %cst = arith.constant dense<0.000000e+00> : vector<16x128xf32>
      %14 = tpu.matmul %12, %13, %cst {dimension_numbers = #tpu.dot_dimension_numbers<[1], [0], [0], [1], [0, 0, 1, 1], [], []>} : vector<16x32xbf16>, vector<32x128xbf16>, vector<16x128xf32> -> vector<16x128xf32>
      %15 = arith.addf %11, %14 : vector<16x128xf32>
      %c0_9 = arith.constant 0 : index
      %c0_10 = arith.constant 0 : index
      %16 = vector.load %arg7[%c0_9, %c0_10] : memref<16x128xf32, #tpu.memory_space<vmem>>, vector<16x128xf32>
      tpu.vector_store %arg7[%c0_9, %c0_10], %15 {strides = array<i32>} : memref<16x128xf32, #tpu.memory_space<vmem>>, vector<16x128xf32>,
    } else {
    }
    %c0_i32_2 = arith.constant 0 : i32
    %8 = arith.cmpi eq, %arg1, %c0_i32_2 : i32
    %9 = arith.extui %8 : i1 to i32
    %c0_i32_3 = arith.constant 0 : i32
    %10 = arith.cmpi ne, %9, %c0_i32_3 : i32
    scf.if %10 {
      %c0 = arith.constant 0 : index
      %c0_4 = arith.constant 0 : index
      %11 = vector.load %arg7[%c0, %c0_4] : memref<16x128xf32, #tpu.memory_space<vmem>>, vector<16x128xf32>
      %c0_5 = arith.constant 0 : index
      %c0_6 = arith.constant 0 : index
      %12 = vector.load %arg6[%c0_5, %c0_6] : memref<16x1xf32, #tpu.memory_space<vmem>>, vector<16x1xf32>
      %13 = vector.broadcast %12 : vector<16x1xf32> to vector<16x128xf32>
      %14 = arith.mulf %11, %13 : vector<16x128xf32>
      %c0_7 = arith.constant 0 : index
      %c0_8 = arith.constant 0 : index
      %15 = vector.load %arg7[%c0_7, %c0_8] : memref<16x128xf32, #tpu.memory_space<vmem>>, vector<16x128xf32>
      tpu.vector_store %arg7[%c0_7, %c0_8], %14 {strides = array<i32>} : memref<16x128xf32, #tpu.memory_space<vmem>>, vector<16x128xf32>,
    } else {
    }
    return
  }
  func.func @transform_0(%arg0: i32, %arg1: i32, %arg2: memref<1xi32, #tpu.memory_space<smem>>, %arg3: memref<1xi32, #tpu.memory_space<smem>>) -> (i32, i32) {
    %c1_i32 = arith.constant 1 : i32
    %0 = arith.muli %arg0, %c1_i32 : i32
    %1 = arith.addi %0, %arg1 : i32
    %2 = arith.index_cast %1 : i32 to index
    %3 = memref.load %arg3[%2] : memref<1xi32, #tpu.memory_space<smem>>
    %c0_i32 = arith.constant 0 : i32
    return %arg0, %3 : i32, i32
  }
  func.func @transform_1(%arg0: i32, %arg1: i32, %arg2: memref<1xi32, #tpu.memory_space<smem>>, %arg3: memref<1xi32, #tpu.memory_space<smem>>) -> (i32, i32) {
    %c1_i32 = arith.constant 1 : i32
    %0 = arith.muli %arg0, %c1_i32 : i32
    %1 = arith.addi %0, %arg1 : i32
    %2 = arith.index_cast %1 : i32 to index
    %3 = memref.load %arg3[%2] : memref<1xi32, #tpu.memory_space<smem>>
    %c0_i32 = arith.constant 0 : i32
    %c0_i32_0 = arith.constant 0 : i32
    return %3, %c0_i32 : i32, i32
  }
  func.func @transform_2(%arg0: i32, %arg1: i32, %arg2: memref<1xi32, #tpu.memory_space<smem>>, %arg3: memref<1xi32, #tpu.memory_space<smem>>) -> (i32, i32) {
    %c0_i32 = arith.constant 0 : i32
    %c0_i32_0 = arith.constant 0 : i32
    return %arg0, %c0_i32 : i32, i32
  }
  func.func @transform_3(%arg0: i32, %arg1: i32, %arg2: memref<1xi32, #tpu.memory_space<smem>>, %arg3: memref<1xi32, #tpu.memory_space<smem>>) -> (i32, i32) {
    %c0_i32 = arith.constant 0 : i32
    %c0_i32_0 = arith.constant 0 : i32
    return %arg0, %c0_i32 : i32, i32
  }
}

</mosaic_0001>

<llo_original>
// kernel: tpu_custom_call.1
$region0: #{tpu_custom_call.1}
  #allocation0 [shape = 'u32[]', space=smem, size = 0x4, offset = 0x4, fixed_abs, tag = 'smem constant byte address 0x4 - core index']
  #allocation1 [shape = 'u32[72,128]{1,0:T(1,128)}', space=vmem, size = 0x9000, scoped, tag = 'internal scratch']
  #allocation2 [shape = 's32[1]{0}', space=sflag, size = 0x4, scoped, tag = 'scoped memory for tpu_custom_call.1']
  #allocation3 [shape = 's32[1]{0:T(128)S(6)}', space=smem, size = 0x200, scoped, tag = 'prefetched SMEM operand 0']
  #allocation4 [shape = 's32[1]{0:T(128)S(6)}', space=smem, size = 0x200, scoped, tag = 'prefetched SMEM operand 1']
  %s0 = inlined_call_operand.<no memory space> [shape: s32[1], index: 0, kind: input, shape index: {}]
  %s1 = inlined_call_operand.<no memory space> [shape: s32[1], index: 1, kind: input, shape index: {}]
  %s2 = inlined_call_operand.hbm [shape: bf16[16,32], index: 2, kind: input, shape index: {}]
  %s3 = inlined_call_operand.vmem [shape: bf16[32,128], index: 3, kind: input, shape index: {}]
  %s4 = inlined_call_operand.vmem [shape: f32[16,1], index: 4, kind: input, shape index: {}]
  %s5 = inlined_call_operand.hbm [shape: f32[16,128], index: 5, kind: output, shape index: {}]
  %s6 = sld [smem:[#allocation0]]
  $region38: #{tpu_custom_call.1} parent=0
    _
  %s8 = ssub.s32 1, %s6
  %s9 = scalar_select 0, %s8, %s6
  %10 = sst [smem:[#allocation3]] %s0
  %11 = sst [smem:[#allocation4]] %s1
  $region1: #{tpu_custom_call.1} parent=0
    #allocation5 [shape = 'u8[4096]{0}', space=vmem, size = 0x1000, scoped, tag = 'input window, operand 2, single buffered']
    #allocation6 [shape = 's32[1]{0}', space=sflag, size = 0x4, scoped, tag = 'scoped memory for tpu_custom_call.1']
    #allocation7 [shape = 's32[1]{0}', space=sflag, size = 0x4, scoped, tag = 'scoped memory for tpu_custom_call.1']
    #allocation8 [shape = 'u8[8192]{0}', space=vmem, size = 0x2000, scoped, tag = 'output window, operand 0, single buffered']
    %12 = vsyncpa [#allocation6], 0
    %13 = vsyncpa [#allocation7], 0
    // Predicated region
    $region2: #{tpu_custom_call.1} parent=1 // pred_check
      _
    $region3: #{tpu_custom_call.1} parent=1 // pred_check_branch
      %15 = sbr.rel (0) target = $region5
    $region4: #{tpu_custom_call.1} parent=1 // pred_region
      %s16 = sadd.s32 0, 0
      %s17 = sld [smem:[#allocation4 + %s16]]
      %19 = vsyncadd [#allocation6], 0
      %s20 = smul.addr %s17, 4
      %s21 = scalar_lea.hbm %s2, %s20
      %s22 = sshll.u32 %s21, 4
      %s23 = int_to_ptr.hbm [resolvable:$true] %s22
      %s24 = sshll.u32 [#allocation5], 4
      %s25 = int_to_ptr.vmem [resolvable:$true] %s24
      %30 = dma.hbm_to_vmem [thread:$0]  %s23, 128, %s25, [#allocation6], 64, 64, 4
    $region5: #{tpu_custom_call.1} parent=1 // pred_fallthru
      _
    // Predicated region
    $region6: #{tpu_custom_call.1} parent=1 // pred_check
      _
    $region7: #{tpu_custom_call.1} parent=1 // pred_check_branch
      %32 = sbr.rel (0) target = $region9
    $region8: #{tpu_custom_call.1} parent=1 // pred_region
      %s33 = sadd.s32 0, 0
      %s34 = sld [smem:[#allocation4 + %s33]]
      %s35 = smul.u32 4, %s34
      %p36 = scmp.lt.s32.totalorder %s35, 3
      %s37 = scalar_select %p36, %s35, 3
      %s38 = smul.addr %s37, 4
      %s39 = scalar_lea.vmem %s3, %s38
      %s40 = sadd.s32 0, 0
      %s41 = sld [smem:[#allocation4 + %s40]]
      %s42 = smul.u32 4, %s41
    $region9: #{tpu_custom_call.1} parent=1 // pred_fallthru
      _
    // Predicated region
    $region10: #{tpu_custom_call.1} parent=1 // pred_check
      _
    $region11: #{tpu_custom_call.1} parent=1 // pred_check_branch
      %44 = sbr.rel (0) target = $region13
    $region12: #{tpu_custom_call.1} parent=1 // pred_region
      _
    $region13: #{tpu_custom_call.1} parent=1 // pred_fallthru
      _
    // Predicated region
    $region14: #{tpu_custom_call.1} parent=1 // pred_check
      _
    $region15: #{tpu_custom_call.1} parent=1 // pred_check_branch
      %46 = sbr.rel (0) target = $region17
    $region16: #{tpu_custom_call.1} parent=1 // pred_region
      %48 = dma.done [#allocation6], 128
    $region17: #{tpu_custom_call.1} parent=1 // pred_fallthru
      _
    %s49 = sadd.s32 0, 0
    %s50 = sld [smem:[#allocation4 + %s49]]
    %s51 = smul.u32 4, %s50
    %p52 = scmp.lt.s32.totalorder %s51, 3
    %s53 = scalar_select %p52, %s51, 3
    %s54 = smul.addr %s53, 4
    %s55 = scalar_lea.vmem %s3, %s54
    %s56 = sadd.s32 0, 0
    %s57 = sld [smem:[#allocation4 + %s56]]
    %s58 = sadd.s32 0, 0
    %s59 = sld [smem:[#allocation4 + %s58]]
    %s60 = smul.u32 4, %s59
    %p61 = scmp.lt.s32.totalorder %s60, 3
    %s62 = scalar_select %p61, %s60, 3
    %s63 = smul.addr %s62, 4
    %s64 = scalar_lea.vmem %s3, %s63
    %s65 = sadd.s32 0, 0
    %s66 = sld [smem:[#allocation4 + %s65]]
    %s67 = smul.u32 4, %s66
    %p69 = scmp.eq.s32.totalorder 0, 0
    // Predicated region
    $region18: #{tpu_custom_call.1} parent=1 // pred_check
      %p70 = pneg %p69
    $region19: #{tpu_custom_call.1} parent=1 // pred_check_branch
      %72 = sbr.rel (%p70) target = $region21
    $region20: #{tpu_custom_call.1} parent=1 // pred_region
      %73 = vst [vmem:[#allocation8] sm:$0xff] 0.0
      %74 = vst [vmem:[#allocation8 + $0x8] sm:$0xff] 0.0
    $region21: #{tpu_custom_call.1} parent=1 // pred_fallthru
      _
    %s75 = sld [smem:[#allocation3]]
    %p76 = scmp.lt.s32.totalorder 0, %s75
    // Predicated region
    $region22: #{tpu_custom_call.1} parent=1 // pred_check
      %p77 = pneg %p76
    $region23: #{tpu_custom_call.1} parent=1 // pred_check_branch
      %79 = sbr.rel (%p77) target = $region25
    $region24: #{tpu_custom_call.1} parent=1 // pred_region
      %v80 = vld [vmem:[#allocation8] sm:$0xff]
      %v81 = vld [vmem:[#allocation8 + $0x8] sm:$0xff]
      %v82 = vld [vmem:[#allocation5] sm:$0xf]
      %v83 = vld [vmem:[#allocation5 + $0x4] sm:$0xf]
      %v84 = vld [vmem:[%s64] sm:$0xf]
      %v85 = vld [vmem:[%s64 + $0x4] sm:$0xf]
      %v86 = vld [vmem:[%s64 + $0x8] sm:$0xf]
      %v87 = vld [vmem:[%s64 + $0xc] sm:$0xf]
      %v90 = vunpack.c.l.b16 %v82
      %v91 = vunpack.c.l.b16 %v83
      %v92 = vpack.c.b16 %v91, %v90
      %v97 = vunpack.c.l.b16 %v84
      %v98 = vunpack.c.l.b16 %v85
      %v99 = vunpack.c.l.b16 %v86
      %v100 = vunpack.c.l.b16 %v87
      %v101 = vpack.c.b16 %v98, %v97
      %v102 = vpack.c.b16 %v100, %v99
      %vm105 = vcmask 261120
      %v107 = vsel %vm105, %v92, 0
      %109 = vmatpush.bf16.msra.mxu0 0
      %110 = vmatpush.bf16.msra.mxu0 0
      %111 = vmatpush.bf16.msra.mxu0 0
      %112 = vmatpush.bf16.msra.mxu0 0
      %113 = vmatpush.bf16.msra.mxu0 0
      %114 = vmatpush.bf16.msra.mxu0 0
      %115 = vmatpush.bf16.msra.mxu0 %v102
      %116 = vmatpush.bf16.msra.mxu0 %v101
      %117 = vmatmul.bf16.gmra.mxu0 %v107
      %v118 = vpop.f32.mrf.mxu0
      %v119 = vadd.f32 0.0, %v118
      %v120 = vpop.f32.mrf.mxu0
      %v121 = vadd.f32 0.0, %v120
      %122 = vdwg.mxu0
      %v123 = vadd.f32 %v80, %v119
      %v124 = vadd.f32 %v81, %v121
      %125 = vst [vmem:[#allocation8] sm:$0xff] %v123
      %126 = vst [vmem:[#allocation8 + $0x8] sm:$0xff] %v124
    $region25: #{tpu_custom_call.1} parent=1 // pred_fallthru
      _
    // Predicated region
    $region26: #{tpu_custom_call.1} parent=1 // pred_check
      %p127 = pneg %p69
    $region27: #{tpu_custom_call.1} parent=1 // pred_check_branch
      %129 = sbr.rel (%p127) target = $region29
    $region28: #{tpu_custom_call.1} parent=1 // pred_region
      %v130 = vld [vmem:[#allocation8] sm:$0xff]
      %v131 = vld [vmem:[#allocation8 + $0x8] sm:$0xff]
      %v132 = vld [vmem:[%s4] sm:$0xff]
      %v133 = vld [vmem:[%s4 + $0x8] sm:$0xff]
      %135 = vset.pattern.permute.xlu0 0
      %136 = vperm.xlu0 %135, %v132
      %v137 = vpop.permute.xlu0 %136
      %140 = vset.pattern.permute.xlu0 0
      %141 = vperm.xlu0 %140, %v133
      %v142 = vpop.permute.xlu0 %141
      %v144 = vmul.f32 %v130, %v137
      %v145 = vmul.f32 %v131, %v142
      %146 = vst [vmem:[#allocation8] sm:$0xff] %v144
      %147 = vst [vmem:[#allocation8 + $0x8] sm:$0xff] %v145
    $region29: #{tpu_custom_call.1} parent=1 // pred_fallthru
      _
    // Predicated region
    $region30: #{tpu_custom_call.1} parent=1 // pred_check
      _
    $region31: #{tpu_custom_call.1} parent=1 // pred_check_branch
      %149 = sbr.rel (0) target = $region33
    $region32: #{tpu_custom_call.1} parent=1 // pred_region
      %151 = vsyncadd [#allocation7], 0
      %s152 = sshll.u32 [#allocation8], 4
      %s153 = int_to_ptr.vmem [resolvable:$true] %s152
      %s154 = sshll.u32 %s5, 4
      %s155 = int_to_ptr.hbm [resolvable:$true] %s154
      %160 = dma.vmem_to_hbm [thread:$0]  %s153, 256, %s155, [#allocation7], 128, 128, 8
    $region33: #{tpu_custom_call.1} parent=1 // pred_fallthru
      _
    // Predicated region
    $region34: #{tpu_custom_call.1} parent=1 // pred_check
      _
    $region35: #{tpu_custom_call.1} parent=1 // pred_check_branch
      %162 = sbr.rel (0) target = $region37
    $region36: #{tpu_custom_call.1} parent=1 // pred_region
      %164 = dma.done [#allocation7], 256
    $region37: #{tpu_custom_call.1} parent=1 // pred_fallthru
      _
    %165 = vsyncpa [#allocation6], 1
    %166 = vsyncpa [#allocation7], 1

</llo_original>
